<compile_context>
chip_gen: v6e
topology: v6e:2x2x1
jax: 0.10.0
libtpu: 0.0.40
codegen_flags: <defaults>
</compile_context>

<pallas_src>
import functools

import jax
import jax.numpy as jnp
from jax.experimental import pallas as pl
from jax.experimental.pallas import tpu as pltpu

_LANES = 128


def _round_up(x: int, m: int) -> int:
    return (x + m - 1) // m * m


def _kl_loss_kernel(t_mu_ref, t_log_ref, s_mu_ref, s_scale_ref, s_log_ref,
                    out_ref, *, log_scale_min):
    t_mu = t_mu_ref[...]
    t_log = jnp.maximum(t_log_ref[...], jnp.float32(log_scale_min))  # clamp(min=)
    s_mu = s_mu_ref[...]
    s_scale = s_scale_ref[...]
    s_log = s_log_ref[...]

    t_scale = jnp.exp(t_log)                       # EUP

    # loss1 = 4 * (t_log - s_log)^2   (square(abs(x)) == square(x))
    d_log = t_log - s_log
    loss1 = 4.0 * d_log * d_log

    # loss2 = log(t_scale / s_scale)
    #         + (s_scale^2 - t_scale^2 + (s_mu - t_mu)^2) / (2 * t_scale^2)
    # with log(t_scale) == t_log (t_scale = exp(t_log)).
    d_mu = s_mu - t_mu
    t_var = t_scale * t_scale
    s_var = s_scale * s_scale
    loss2 = (t_log - jnp.log(s_scale)
             + (s_var - t_var + d_mu * d_mu) / (2.0 * t_var))

    out_ref[...] = loss1 + loss2


def kl_loss(teacher_output, student_mu, student_scale, student_log_scale,
            *, log_scale_min=-7.0, max_tile_lanes=4096,
            tile_vmem_budget_bytes=8 * 1024 * 1024):
    """Pallas TPU implementation of KLLoss.forward.

    teacher_output:       [B, 2, T] float32  ({mu, log_scale} on channel axis)
    student_mu/scale/log: [B, T]    float32
    returns:              [B, T-1]  float32  (element-wise KL, no reduction)
    """
    B, C, T = teacher_output.shape
    assert C == 2 and T >= 2
    assert student_mu.shape == (B, T)
    assert student_scale.shape == (B, T)
    assert student_log_scale.shape == (B, T)
    n = T - 1
    f32 = jnp.float32

    # Shift / split once at the boundary so the kernel sees equal-shape,
    # lane-aligned [B, n] streams.
    t_mu = teacher_output[:, 0, :n].astype(f32)
    t_log = teacher_output[:, 1, :n].astype(f32)
    s_mu = student_mu[:, 1:].astype(f32)
    s_scale = student_scale[:, 1:].astype(f32)
    s_log = student_log_scale[:, 1:].astype(f32)

    # Lane tile: multiple of 128, sized so 6 double-buffered (B, tile) f32
    # streams stay well under the scoped-VMEM limit on every TPU generation.
    bytes_per_lane = B * 4 * 6 * 2            # 6 streams, double-buffered, f32
    tile = (tile_vmem_budget_bytes // bytes_per_lane) // _LANES * _LANES
    tile = max(_LANES, min(tile, max_tile_lanes, _round_up(n, _LANES)))
    n_pad = _round_up(n, tile)

    def pad(x, value):
        if n_pad == n:
            return x
        return jnp.pad(x, ((0, 0), (0, n_pad - n)), constant_values=value)

    # Benign pad values (scale = 1) so the (trimmed) tail never produces
    # inf/nan noise.
    inputs = (pad(t_mu, 0.0), pad(t_log, 0.0), pad(s_mu, 0.0),
              pad(s_scale, 1.0), pad(s_log, 0.0))

    spec = pl.BlockSpec((B, tile), lambda i: (0, i))
    kernel = functools.partial(_kl_loss_kernel,
                               log_scale_min=float(log_scale_min))

    out = pl.pallas_call(
        kernel,
        out_shape=jax.ShapeDtypeStruct((B, n_pad), f32),
        grid=(n_pad // tile,),
        in_specs=[spec] * 5,
        out_specs=spec,
        compiler_params=pltpu.CompilerParams(
            dimension_semantics=("parallel",),       # shards across v7x's 2 TCs
            vmem_limit_bytes=32 * 1024 * 1024),
    )(*inputs)

    return out[:, :n]


def _kl_loss_ref(teacher_output, student_mu, student_scale, student_log_scale,
                 *, log_scale_min=-7.0):
    # Pure-JAX reference mirroring the PyTorch module, for validation.
    s_mu = student_mu[:, 1:]
    s_scale = student_scale[:, 1:]
    s_log_scale = student_log_scale[:, 1:]
    t_mu = teacher_output[:, 0, :-1]
    t_log_scale = jnp.maximum(teacher_output[:, 1, :-1], log_scale_min)
    t_scale = jnp.exp(t_log_scale)
    loss1 = 4.0 * jnp.square(jnp.abs(t_log_scale - s_log_scale))
    loss2 = (jnp.log(t_scale / s_scale)
             + (jnp.square(s_scale) - jnp.square(t_scale)
                + jnp.square(s_mu - t_mu)) / (2.0 * jnp.square(t_scale)))
    return loss1 + loss2


if __name__ == "__main__":
    key = jax.random.PRNGKey(0)
    log_scale_min = -7.0

    # Small primary shape + one ragged shape to exercise padding / multi-tile.
    for (B, T) in ((2, 16), (3, 300)):
        k1, k2, k3, key = jax.random.split(key, 4)
        teacher_output = jax.random.normal(k1, (B, 2, T), dtype=jnp.float32)
        student_mu = jax.random.normal(k2, (B, T), dtype=jnp.float32)
        student_log_scale = 0.3 * jax.random.normal(k3, (B, T), dtype=jnp.float32)
        student_scale = jnp.exp(student_log_scale)

        out = kl_loss(teacher_output, student_mu, student_scale,
                      student_log_scale, log_scale_min=log_scale_min)
        out = jax.block_until_ready(out)

        ref = _kl_loss_ref(teacher_output, student_mu, student_scale,
                           student_log_scale, log_scale_min=log_scale_min)
        assert out.shape == (B, T - 1)
        assert jnp.allclose(out, ref, atol=1e-5, rtol=1e-5), \
            f"mismatch vs reference for shape B={B}, T={T}"

    print("KERNEL_OK")
</pallas_src>

<mosaic_0001>
module attributes {stable_mosaic.version = 11 : i64} {
  func.func @_kl_loss_kernel(%arg0: i32, %arg1: memref<2x128xf32, #tpu.memory_space<vmem>>, %arg2: memref<2x128xf32, #tpu.memory_space<vmem>>, %arg3: memref<2x128xf32, #tpu.memory_space<vmem>>, %arg4: memref<2x128xf32, #tpu.memory_space<vmem>>, %arg5: memref<2x128xf32, #tpu.memory_space<vmem>>, %arg6: memref<2x128xf32, #tpu.memory_space<vmem>>) attributes {dimension_semantics = [#tpu.dimension_semantics<parallel>], iteration_bounds = array<i64: 1>, scalar_prefetch = 0 : i64, scratch_operands = 0 : i64, tpu.core_type = #tpu.core_type<tc>, window_params = [{transform_indices = @transform_0, window_bounds = array<i64: 2, 128>}, {transform_indices = @transform_1, window_bounds = array<i64: 2, 128>}, {transform_indices = @transform_2, window_bounds = array<i64: 2, 128>}, {transform_indices = @transform_3, window_bounds = array<i64: 2, 128>}, {transform_indices = @transform_4, window_bounds = array<i64: 2, 128>}, {transform_indices = @transform_5, window_bounds = array<i64: 2, 128>}]} {
    %c0 = arith.constant 0 : index
    %c0_0 = arith.constant 0 : index
    %0 = vector.load %arg1[%c0, %c0_0] : memref<2x128xf32, #tpu.memory_space<vmem>>, vector<2x128xf32>
    %c0_1 = arith.constant 0 : index
    %c0_2 = arith.constant 0 : index
    %1 = vector.load %arg2[%c0_1, %c0_2] : memref<2x128xf32, #tpu.memory_space<vmem>>, vector<2x128xf32>
    %cst = arith.constant -7.000000e+00 : f32
    %2 = vector.broadcast %cst : f32 to vector<2x128xf32>
    %3 = arith.maximumf %1, %2 : vector<2x128xf32>
    %c0_3 = arith.constant 0 : index
    %c0_4 = arith.constant 0 : index
    %4 = vector.load %arg3[%c0_3, %c0_4] : memref<2x128xf32, #tpu.memory_space<vmem>>, vector<2x128xf32>
    %c0_5 = arith.constant 0 : index
    %c0_6 = arith.constant 0 : index
    %5 = vector.load %arg4[%c0_5, %c0_6] : memref<2x128xf32, #tpu.memory_space<vmem>>, vector<2x128xf32>
    %c0_7 = arith.constant 0 : index
    %c0_8 = arith.constant 0 : index
    %6 = vector.load %arg5[%c0_7, %c0_8] : memref<2x128xf32, #tpu.memory_space<vmem>>, vector<2x128xf32>
    %7 = math.exp %3 : vector<2x128xf32>
    %8 = arith.subf %3, %6 : vector<2x128xf32>
    %cst_9 = arith.constant 4.000000e+00 : f32
    %9 = vector.broadcast %cst_9 : f32 to vector<2x128xf32>
    %10 = arith.mulf %9, %8 : vector<2x128xf32>
    %11 = arith.mulf %10, %8 : vector<2x128xf32>
    %12 = arith.subf %4, %0 : vector<2x128xf32>
    %13 = arith.mulf %7, %7 : vector<2x128xf32>
    %14 = arith.mulf %5, %5 : vector<2x128xf32>
    %15 = math.log %5 : vector<2x128xf32>
    %16 = arith.subf %3, %15 : vector<2x128xf32>
    %17 = arith.subf %14, %13 : vector<2x128xf32>
    %18 = arith.mulf %12, %12 : vector<2x128xf32>
    %19 = arith.addf %17, %18 : vector<2x128xf32>
    %cst_10 = arith.constant 2.000000e+00 : f32
    %20 = vector.broadcast %cst_10 : f32 to vector<2x128xf32>
    %21 = arith.mulf %20, %13 : vector<2x128xf32>
    %22 = arith.divf %19, %21 : vector<2x128xf32>
    %23 = arith.addf %16, %22 : vector<2x128xf32>
    %24 = arith.addf %11, %23 : vector<2x128xf32>
    %c0_11 = arith.constant 0 : index
    %c0_12 = arith.constant 0 : index
    %25 = vector.load %arg6[%c0_11, %c0_12] : memref<2x128xf32, #tpu.memory_space<vmem>>, vector<2x128xf32>
    tpu.vector_store %arg6[%c0_11, %c0_12], %24 {strides = array<i32>} : memref<2x128xf32, #tpu.memory_space<vmem>>, vector<2x128xf32>,
    return
  }
  func.func @transform_0(%arg0: i32) -> (i32, i32) {
    %c0_i32 = arith.constant 0 : i32
    %c0_i32_0 = arith.constant 0 : i32
    return %c0_i32, %arg0 : i32, i32
  }
  func.func @transform_1(%arg0: i32) -> (i32, i32) {
    %c0_i32 = arith.constant 0 : i32
    %c0_i32_0 = arith.constant 0 : i32
    return %c0_i32, %arg0 : i32, i32
  }
  func.func @transform_2(%arg0: i32) -> (i32, i32) {
    %c0_i32 = arith.constant 0 : i32
    %c0_i32_0 = arith.constant 0 : i32
    return %c0_i32, %arg0 : i32, i32
  }
  func.func @transform_3(%arg0: i32) -> (i32, i32) {
    %c0_i32 = arith.constant 0 : i32
    %c0_i32_0 = arith.constant 0 : i32
    return %c0_i32, %arg0 : i32, i32
  }
  func.func @transform_4(%arg0: i32) -> (i32, i32) {
    %c0_i32 = arith.constant 0 : i32
    %c0_i32_0 = arith.constant 0 : i32
    return %c0_i32, %arg0 : i32, i32
  }
  func.func @transform_5(%arg0: i32) -> (i32, i32) {
    %c0_i32 = arith.constant 0 : i32
    %c0_i32_0 = arith.constant 0 : i32
    return %c0_i32, %arg0 : i32, i32
  }
}

</mosaic_0001>

<llo_original>
// kernel: tpu_custom_call.1
$region0: #{tpu_custom_call.1}
  #allocation0 [shape = 'u32[]', space=smem, size = 0x4, offset = 0x4, fixed_abs, tag = 'smem constant byte address 0x4 - core index']
  #allocation1 [shape = 'u32[144,128]{1,0:T(1,128)}', space=vmem, size = 0x12000, scoped, tag = 'internal scratch']
  %s0 = inlined_call_operand.hbm [shape: f32[2,128], index: 0, kind: input, shape index: {}]
  %s1 = inlined_call_operand.hbm [shape: f32[2,128], index: 1, kind: input, shape index: {}]
  %s2 = inlined_call_operand.vmem [shape: f32[2,128], index: 2, kind: input, shape index: {}]
  %s3 = inlined_call_operand.vmem [shape: f32[2,128], index: 3, kind: input, shape index: {}]
  %s4 = inlined_call_operand.vmem [shape: f32[2,128], index: 4, kind: input, shape index: {}]
  %s5 = inlined_call_operand.hbm [shape: f32[2,128], index: 5, kind: output, shape index: {}]
  %s6 = sld [smem:[#allocation0]]
  $region38: #{tpu_custom_call.1} parent=0
    _
  %s8 = ssub.s32 1, %s6
  %s9 = scalar_select 0, %s8, %s6
  $region1: #{tpu_custom_call.1} parent=0
    #allocation2 [shape = 'u8[1024]{0}', space=vmem, size = 0x400, scoped, tag = 'input window, operand 0, single buffered']
    #allocation3 [shape = 's32[1]{0}', space=sflag, size = 0x4, scoped, tag = 'scoped memory for tpu_custom_call.1']
    #allocation4 [shape = 's32[1]{0}', space=sflag, size = 0x4, scoped, tag = 'scoped memory for tpu_custom_call.1']
    #allocation5 [shape = 'u8[1024]{0}', space=vmem, size = 0x400, scoped, tag = 'input window, operand 1, single buffered']
    #allocation6 [shape = 's32[1]{0}', space=sflag, size = 0x4, scoped, tag = 'scoped memory for tpu_custom_call.1']
    #allocation7 [shape = 'u8[1024]{0}', space=vmem, size = 0x400, scoped, tag = 'output window, operand 0, single buffered']
    %10 = vsyncpa [#allocation3], 0
    %11 = vsyncpa [#allocation6], 0
    %12 = vsyncpa [#allocation4], 0
    // Predicated region
    $region2: #{tpu_custom_call.1} parent=1 // pred_check
      _
    $region3: #{tpu_custom_call.1} parent=1 // pred_check_branch
      %14 = sbr.rel (0) target = $region5
    $region4: #{tpu_custom_call.1} parent=1 // pred_region
      %s16 = ssub.s32 32, 32
      %17 = vsyncadd [#allocation3], %s16
      %s19 = sshll.u32 [#allocation2], 4
      %s20 = int_to_ptr.vmem [resolvable:$true] %s19
      %22 = dma.hbm_to_vmem [thread:$0]  %s0, 32, %s20, [#allocation3]
    $region5: #{tpu_custom_call.1} parent=1 // pred_fallthru
      _
    // Predicated region
    $region6: #{tpu_custom_call.1} parent=1 // pred_check
      _
    $region7: #{tpu_custom_call.1} parent=1 // pred_check_branch
      %24 = sbr.rel (0) target = $region9
    $region8: #{tpu_custom_call.1} parent=1 // pred_region
      %s26 = ssub.s32 32, 32
      %27 = vsyncadd [#allocation6], %s26
      %s29 = sshll.u32 [#allocation5], 4
      %s30 = int_to_ptr.vmem [resolvable:$true] %s29
      %32 = dma.hbm_to_vmem [thread:$0]  %s1, 32, %s30, [#allocation6]
    $region9: #{tpu_custom_call.1} parent=1 // pred_fallthru
      _
    // Predicated region
    $region10: #{tpu_custom_call.1} parent=1 // pred_check
      _
    $region11: #{tpu_custom_call.1} parent=1 // pred_check_branch
      %34 = sbr.rel (0) target = $region13
    $region12: #{tpu_custom_call.1} parent=1 // pred_region
      _
    $region13: #{tpu_custom_call.1} parent=1 // pred_fallthru
      _
    // Predicated region
    $region14: #{tpu_custom_call.1} parent=1 // pred_check
      _
    $region15: #{tpu_custom_call.1} parent=1 // pred_check_branch
      %36 = sbr.rel (0) target = $region17
    $region16: #{tpu_custom_call.1} parent=1 // pred_region
      _
    $region17: #{tpu_custom_call.1} parent=1 // pred_fallthru
      _
    // Predicated region
    $region18: #{tpu_custom_call.1} parent=1 // pred_check
      _
    $region19: #{tpu_custom_call.1} parent=1 // pred_check_branch
      %38 = sbr.rel (0) target = $region21
    $region20: #{tpu_custom_call.1} parent=1 // pred_region
      _
    $region21: #{tpu_custom_call.1} parent=1 // pred_fallthru
      _
    // Predicated region
    $region22: #{tpu_custom_call.1} parent=1 // pred_check
      _
    $region23: #{tpu_custom_call.1} parent=1 // pred_check_branch
      %40 = sbr.rel (0) target = $region25
    $region24: #{tpu_custom_call.1} parent=1 // pred_region
      %41 = dma.done [#allocation3], 32
    $region25: #{tpu_custom_call.1} parent=1 // pred_fallthru
      _
    // Predicated region
    $region26: #{tpu_custom_call.1} parent=1 // pred_check
      _
    $region27: #{tpu_custom_call.1} parent=1 // pred_check_branch
      %43 = sbr.rel (0) target = $region29
    $region28: #{tpu_custom_call.1} parent=1 // pred_region
      %44 = dma.done [#allocation6], 32
    $region29: #{tpu_custom_call.1} parent=1 // pred_fallthru
      _
    %v45 = vld [vmem:[#allocation2] sm:$0x3]
    %v46 = vld [vmem:[#allocation5] sm:$0x3]
    %v47 = vmax.f32 %v46, -7.0
    %v48 = vld [vmem:[%s2] sm:$0x3]
    %v49 = vld [vmem:[%s3] sm:$0x3]
    %v50 = vld [vmem:[%s4] sm:$0x3]
    %v51 = vmul.f32 %v47, 1.442695
    %v52 = vpow.pop %v51
    %v53 = vsub.f32 %v47, %v50
    %v54 = vmul.f32 %v53, 4.0
    %v55 = vmul.f32 %v54, %v53
    %v56 = vsub.f32 %v48, %v45
    %v57 = vmul.f32 %v52, %v52
    %v58 = vmul.f32 %v49, %v49
    %v59 = vlog2.pop %v49
    %v60 = vmul.f32 %v59, 0.6931472
    %v61 = vsub.f32 %v47, %v60
    %v62 = vsub.f32 %v58, %v57
    %v63 = vmul.f32 %v56, %v56
    %v64 = vadd.f32 %v62, %v63
    %v65 = vmul.f32 %v57, 2.0
    %v66 = vrcp.pop %v65
    %v67 = vmul.f32 %v64, %v66
    %v68 = vadd.f32 %v61, %v67
    %v69 = vadd.f32 %v55, %v68
    %70 = vst [vmem:[#allocation7] sm:$0x3] %v69
    // Predicated region
    $region30: #{tpu_custom_call.1} parent=1 // pred_check
      _
    $region31: #{tpu_custom_call.1} parent=1 // pred_check_branch
      %72 = sbr.rel (0) target = $region33
    $region32: #{tpu_custom_call.1} parent=1 // pred_region
      %s74 = ssub.s32 32, 32
      %75 = vsyncadd [#allocation4], %s74
      %s77 = sshll.u32 [#allocation7], 4
      %s78 = int_to_ptr.vmem [resolvable:$true] %s77
      %80 = dma.vmem_to_hbm [thread:$0]  %s78, 32, %s5, [#allocation4]
    $region33: #{tpu_custom_call.1} parent=1 // pred_fallthru
      _
    // Predicated region
    $region34: #{tpu_custom_call.1} parent=1 // pred_check
      _
    $region35: #{tpu_custom_call.1} parent=1 // pred_check_branch
      %82 = sbr.rel (0) target = $region37
    $region36: #{tpu_custom_call.1} parent=1 // pred_region
      %83 = dma.done [#allocation4], 32
    $region37: #{tpu_custom_call.1} parent=1 // pred_fallthru
      _
    %84 = vsyncpa [#allocation3], 1
    %85 = vsyncpa [#allocation6], 1
    %86 = vsyncpa [#allocation4], 1

</llo_original>
